<compile_context>
chip_gen: v5e
topology: v5e:2x2
jax: 0.10.0
libtpu: 0.0.40
codegen_flags: <defaults>
</compile_context>

<pallas_src>
import functools

import jax
import jax.numpy as jnp
from jax.experimental import pallas as pl
from jax.experimental.pallas import tpu as pltpu


def _adapter_kernel(x_ref, res_ref, wd_ref, bd_ref, wu_ref, bu_ref,
                    out_ref, down_ref, up_ref, *, scaling):
    # Down-projection on the MXU in the operands' native dtype, f32 accumulate.
    h = jnp.dot(x_ref[...], wd_ref[...], preferred_element_type=jnp.float32)
    h = h + bd_ref[...].astype(jnp.float32)

    # swish / SiLU: h * sigmoid(h)  (f32 elementwise; exp goes to the EUP)
    down = h * jax.nn.sigmoid(h)

    # Up-projection: cast activation to the weight dtype (no-op for f32
    # weights, bf16 feed for bf16 weights), f32 accumulate.
    up = jnp.dot(down.astype(wu_ref.dtype), wu_ref[...],
                 preferred_element_type=jnp.float32)
    up = up + bu_ref[...].astype(jnp.float32)
    if scaling != 1.0:
        up = up * scaling

    # adapter_residual_before_ln=False, ln_after=False  =>  output = up + residual
    out = up + res_ref[...].astype(jnp.float32)

    down_ref[...] = down.astype(down_ref.dtype)
    up_ref[...] = up.astype(up_ref.dtype)
    out_ref[...] = out.astype(out_ref.dtype)


def _pick_tile_m(M, H, D, act_bytes, *, target=512,
                 vmem_budget=40 * 1024 * 1024):
    """Largest tile_m <= target that divides M, is a multiple of 8 sublanes
    (or equals M), and fits the VMEM budget.

    Budget model: x, residual, out, up tiles are (tile_m, H), down is
    (tile_m, D), all double-buffered by the pipeline; the weight/bias blocks
    have constant index maps (fetched once, kept resident) but are also
    double-buffered, so they are charged twice as well.
    """
    weight_bytes = 2 * act_bytes * (2 * H * D + H + D)

    def fits(t):
        act = 2 * act_bytes * t * (4 * H + D)
        return act + weight_bytes <= vmem_budget

    upper = min(target, M)
    for t in range(upper, 0, -1):
        if M % t == 0 and (t % 8 == 0 or t == M) and fits(t):
            return t
    # TODO(synk): ragged / oversized M with no fitting divisor — fall back to a
    # single tile; a masked partial-tile path is not implemented.
    return M


def adapter_forward(x, residual, w_down, b_down, w_up, b_up,
                    *, scaling=1.0, tile_m=None):
    """x, residual: (B, S, H). w_down: (H, D), w_up: (D, H).

    Returns (output, down, up) with shapes (B,S,H), (B,S,D), (B,S,H).
    """
    B, S, H = x.shape
    D = w_down.shape[1]
    M = B * S

    if tile_m is None:
        tile_m = _pick_tile_m(M, H, D, jnp.dtype(x.dtype).itemsize)
    assert M % tile_m == 0  # TODO(synk): no masking path for a partial last tile

    x2 = x.reshape(M, H)
    r2 = residual.reshape(M, H)
    bd = b_down.reshape(1, D)
    bu = b_up.reshape(1, H)

    grid = (M // tile_m,)

    kernel = functools.partial(_adapter_kernel, scaling=float(scaling))

    out2, down2, up2 = pl.pallas_call(
        kernel,
        out_shape=(
            jax.ShapeDtypeStruct((M, H), x.dtype),   # output
            jax.ShapeDtypeStruct((M, D), x.dtype),   # down
            jax.ShapeDtypeStruct((M, H), x.dtype),   # up
        ),
        grid_spec=pltpu.PrefetchScalarGridSpec(
            num_scalar_prefetch=0,
            grid=grid,
            in_specs=[
                pl.BlockSpec((tile_m, H), lambda i: (i, 0)),   # x tile
                pl.BlockSpec((tile_m, H), lambda i: (i, 0)),   # residual tile
                pl.BlockSpec((H, D), lambda i: (0, 0)),        # W_down (resident)
                pl.BlockSpec((1, D), lambda i: (0, 0)),        # b_down (resident)
                pl.BlockSpec((D, H), lambda i: (0, 0)),        # W_up (resident)
                pl.BlockSpec((1, H), lambda i: (0, 0)),        # b_up (resident)
            ],
            out_specs=[
                pl.BlockSpec((tile_m, H), lambda i: (i, 0)),
                pl.BlockSpec((tile_m, D), lambda i: (i, 0)),
                pl.BlockSpec((tile_m, H), lambda i: (i, 0)),
            ],
        ),
        compiler_params=pltpu.CompilerParams(
            dimension_semantics=("parallel",),      # shards M across TCs on v7x
            vmem_limit_bytes=48 * 1024 * 1024,
        ),
    )(x2, r2, w_down, bd, w_up, bu)

    return (out2.reshape(B, S, H), down2.reshape(B, S, D), up2.reshape(B, S, H))


def reference_forward(x, residual, w_down, b_down, w_up, b_up, scaling=1.0):
    h = jnp.einsum("bsh,hd->bsd", x, w_down) + b_down
    down = h * jax.nn.sigmoid(h)
    up = (jnp.einsum("bsd,dh->bsh", down, w_up) + b_up) * scaling
    return up + residual, down, up


if __name__ == "__main__":
    # Module config (defaults): input_size=32, reduction_factor=16 -> down_sample=2,
    # non_linearity='swish', init_weights='bert', scaling=1.0.
    B, S, H = 2, 8, 32
    reduction_factor = 16
    D = max(H // reduction_factor, 1)
    scaling = 1.0

    key = jax.random.PRNGKey(0)
    kx, kr, kwd, kwu = jax.random.split(key, 4)

    x = jax.random.normal(kx, (B, S, H), dtype=jnp.float32)
    residual = jax.random.normal(kr, (B, S, H), dtype=jnp.float32)

    # bert init: weights ~ N(0, 0.02), biases zero. Stored as (in, out).
    w_down = 0.02 * jax.random.normal(kwd, (H, D), dtype=jnp.float32)
    b_down = jnp.zeros((D,), dtype=jnp.float32)
    w_up = 0.02 * jax.random.normal(kwu, (D, H), dtype=jnp.float32)
    b_up = jnp.zeros((H,), dtype=jnp.float32)

    out, down, up = adapter_forward(x, residual, w_down, b_down, w_up, b_up,
                                    scaling=scaling)
    jax.block_until_ready((out, down, up))

    ref_out, ref_down, ref_up = reference_forward(x, residual, w_down, b_down,
                                                  w_up, b_up, scaling)
    assert jnp.allclose(out, ref_out, atol=1e-5, rtol=1e-5)
    assert jnp.allclose(down, ref_down, atol=1e-5, rtol=1e-5)
    assert jnp.allclose(up, ref_up, atol=1e-5, rtol=1e-5)

    print("KERNEL_OK")
</pallas_src>

<mosaic_0001>
module attributes {stable_mosaic.version = 11 : i64} {
  func.func @_adapter_kernel(%arg0: i32, %arg1: memref<16x32xf32, #tpu.memory_space<vmem>>, %arg2: memref<16x32xf32, #tpu.memory_space<vmem>>, %arg3: memref<32x2xf32, #tpu.memory_space<vmem>>, %arg4: memref<1x2xf32, #tpu.memory_space<vmem>>, %arg5: memref<2x32xf32, #tpu.memory_space<vmem>>, %arg6: memref<1x32xf32, #tpu.memory_space<vmem>>, %arg7: memref<16x32xf32, #tpu.memory_space<vmem>>, %arg8: memref<16x2xf32, #tpu.memory_space<vmem>>, %arg9: memref<16x32xf32, #tpu.memory_space<vmem>>) attributes {dimension_semantics = [#tpu.dimension_semantics<parallel>], iteration_bounds = array<i64: 1>, scalar_prefetch = 0 : i64, scratch_operands = 0 : i64, tpu.core_type = #tpu.core_type<tc>, window_params = [{transform_indices = @transform_0, window_bounds = array<i64: 16, 32>}, {transform_indices = @transform_1, window_bounds = array<i64: 16, 32>}, {pipeline_mode = #tpu.pipeline_mode<synchronous>, transform_indices = @transform_2, window_bounds = array<i64: 32, 2>}, {pipeline_mode = #tpu.pipeline_mode<synchronous>, transform_indices = @transform_3, window_bounds = array<i64: 1, 2>}, {pipeline_mode = #tpu.pipeline_mode<synchronous>, transform_indices = @transform_4, window_bounds = array<i64: 2, 32>}, {pipeline_mode = #tpu.pipeline_mode<synchronous>, transform_indices = @transform_5, window_bounds = array<i64: 1, 32>}, {transform_indices = @transform_6, window_bounds = array<i64: 16, 32>}, {transform_indices = @transform_7, window_bounds = array<i64: 16, 2>}, {transform_indices = @transform_8, window_bounds = array<i64: 16, 32>}]} {
    %c0 = arith.constant 0 : index
    %c0_0 = arith.constant 0 : index
    %0 = vector.load %arg1[%c0, %c0_0] : memref<16x32xf32, #tpu.memory_space<vmem>>, vector<16x32xf32>
    %c0_1 = arith.constant 0 : index
    %c0_2 = arith.constant 0 : index
    %1 = vector.load %arg3[%c0_1, %c0_2] : memref<32x2xf32, #tpu.memory_space<vmem>>, vector<32x2xf32>
    %cst = arith.constant dense<0.000000e+00> : vector<16x2xf32>
    %2 = tpu.matmul %0, %1, %cst {dimension_numbers = #tpu.dot_dimension_numbers<[1], [0], [0], [1], [0, 0, 1, 1], [], []>} : vector<16x32xf32>, vector<32x2xf32>, vector<16x2xf32> -> vector<16x2xf32>
    %c0_3 = arith.constant 0 : index
    %c0_4 = arith.constant 0 : index
    %3 = vector.load %arg4[%c0_3, %c0_4] : memref<1x2xf32, #tpu.memory_space<vmem>>, vector<1x2xf32>
    %4 = vector.broadcast %3 : vector<1x2xf32> to vector<16x2xf32>
    %5 = arith.addf %2, %4 : vector<16x2xf32>
    %6 = arith.negf %5 : vector<16x2xf32>
    %7 = math.exp %6 : vector<16x2xf32>
    %cst_5 = arith.constant 1.000000e+00 : f32
    %8 = vector.broadcast %cst_5 : f32 to vector<16x2xf32>
    %9 = arith.addf %8, %7 : vector<16x2xf32>
    %10 = arith.divf %8, %9 : vector<16x2xf32>
    %11 = arith.mulf %5, %10 : vector<16x2xf32>
    %c0_6 = arith.constant 0 : index
    %c0_7 = arith.constant 0 : index
    %12 = vector.load %arg5[%c0_6, %c0_7] : memref<2x32xf32, #tpu.memory_space<vmem>>, vector<2x32xf32>
    %cst_8 = arith.constant dense<0.000000e+00> : vector<16x32xf32>
    %13 = tpu.matmul %11, %12, %cst_8 {dimension_numbers = #tpu.dot_dimension_numbers<[1], [0], [0], [1], [0, 0, 1, 1], [], []>} : vector<16x2xf32>, vector<2x32xf32>, vector<16x32xf32> -> vector<16x32xf32>
    %c0_9 = arith.constant 0 : index
    %c0_10 = arith.constant 0 : index
    %14 = vector.load %arg6[%c0_9, %c0_10] : memref<1x32xf32, #tpu.memory_space<vmem>>, vector<1x32xf32>
    %15 = vector.broadcast %14 : vector<1x32xf32> to vector<16x32xf32>
    %16 = arith.addf %13, %15 : vector<16x32xf32>
    %c0_11 = arith.constant 0 : index
    %c0_12 = arith.constant 0 : index
    %17 = vector.load %arg2[%c0_11, %c0_12] : memref<16x32xf32, #tpu.memory_space<vmem>>, vector<16x32xf32>
    %18 = arith.addf %16, %17 : vector<16x32xf32>
    %c0_13 = arith.constant 0 : index
    %c0_14 = arith.constant 0 : index
    %19 = vector.load %arg8[%c0_13, %c0_14] : memref<16x2xf32, #tpu.memory_space<vmem>>, vector<16x2xf32>
    tpu.vector_store %arg8[%c0_13, %c0_14], %11 {strides = array<i32>} : memref<16x2xf32, #tpu.memory_space<vmem>>, vector<16x2xf32>,
    %c0_15 = arith.constant 0 : index
    %c0_16 = arith.constant 0 : index
    %20 = vector.load %arg9[%c0_15, %c0_16] : memref<16x32xf32, #tpu.memory_space<vmem>>, vector<16x32xf32>
    tpu.vector_store %arg9[%c0_15, %c0_16], %16 {strides = array<i32>} : memref<16x32xf32, #tpu.memory_space<vmem>>, vector<16x32xf32>,
    %c0_17 = arith.constant 0 : index
    %c0_18 = arith.constant 0 : index
    %21 = vector.load %arg7[%c0_17, %c0_18] : memref<16x32xf32, #tpu.memory_space<vmem>>, vector<16x32xf32>
    tpu.vector_store %arg7[%c0_17, %c0_18], %18 {strides = array<i32>} : memref<16x32xf32, #tpu.memory_space<vmem>>, vector<16x32xf32>,
    return
  }
  func.func @transform_0(%arg0: i32) -> (i32, i32) {
    %c0_i32 = arith.constant 0 : i32
    %c0_i32_0 = arith.constant 0 : i32
    return %arg0, %c0_i32 : i32, i32
  }
  func.func @transform_1(%arg0: i32) -> (i32, i32) {
    %c0_i32 = arith.constant 0 : i32
    %c0_i32_0 = arith.constant 0 : i32
    return %arg0, %c0_i32 : i32, i32
  }
  func.func @transform_2(%arg0: i32) -> (i32, i32) {
    %c0_i32 = arith.constant 0 : i32
    %c0_i32_0 = arith.constant 0 : i32
    %c0_i32_1 = arith.constant 0 : i32
    return %c0_i32, %c0_i32_0 : i32, i32
  }
  func.func @transform_3(%arg0: i32) -> (i32, i32) {
    %c0_i32 = arith.constant 0 : i32
    %c0_i32_0 = arith.constant 0 : i32
    %c0_i32_1 = arith.constant 0 : i32
    return %c0_i32, %c0_i32_0 : i32, i32
  }
  func.func @transform_4(%arg0: i32) -> (i32, i32) {
    %c0_i32 = arith.constant 0 : i32
    %c0_i32_0 = arith.constant 0 : i32
    %c0_i32_1 = arith.constant 0 : i32
    return %c0_i32, %c0_i32_0 : i32, i32
  }
  func.func @transform_5(%arg0: i32) -> (i32, i32) {
    %c0_i32 = arith.constant 0 : i32
    %c0_i32_0 = arith.constant 0 : i32
    %c0_i32_1 = arith.constant 0 : i32
    return %c0_i32, %c0_i32_0 : i32, i32
  }
  func.func @transform_6(%arg0: i32) -> (i32, i32) {
    %c0_i32 = arith.constant 0 : i32
    %c0_i32_0 = arith.constant 0 : i32
    return %arg0, %c0_i32 : i32, i32
  }
  func.func @transform_7(%arg0: i32) -> (i32, i32) {
    %c0_i32 = arith.constant 0 : i32
    %c0_i32_0 = arith.constant 0 : i32
    return %arg0, %c0_i32 : i32, i32
  }
  func.func @transform_8(%arg0: i32) -> (i32, i32) {
    %c0_i32 = arith.constant 0 : i32
    %c0_i32_0 = arith.constant 0 : i32
    return %arg0, %c0_i32 : i32, i32
  }
}

</mosaic_0001>

<llo_original>
// kernel: tpu_custom_call.1
$region0: #{tpu_custom_call.1}
  #allocation0 [shape = 'u32[]', space=smem, size = 0x4, offset = 0x4, fixed_abs, tag = 'smem constant byte address 0x4 - core index']
  #allocation1 [shape = 'u32[72,128]{1,0:T(1,128)}', space=vmem, size = 0x9000, scoped, tag = 'internal scratch']
  %s0 = inlined_call_operand.vmem [shape: f32[16,32], index: 0, kind: input, shape index: {}]
  %s1 = inlined_call_operand.vmem [shape: f32[16,32], index: 1, kind: input, shape index: {}]
  %s2 = inlined_call_operand.vmem [shape: f32[32,2], index: 2, kind: input, shape index: {}]
  %s3 = inlined_call_operand.vmem [shape: f32[1,2], index: 3, kind: input, shape index: {}]
  %s4 = inlined_call_operand.vmem [shape: f32[2,32], index: 4, kind: input, shape index: {}]
  %s5 = inlined_call_operand.vmem [shape: f32[1,32], index: 5, kind: input, shape index: {}]
  %s6 = inlined_call_operand.hbm [shape: f32[16,32], index: 6, kind: output, shape index: {0}]
  %s7 = inlined_call_operand.vmem [shape: f32[16,2], index: 7, kind: output, shape index: {1}]
  %s8 = inlined_call_operand.hbm [shape: f32[16,32], index: 8, kind: output, shape index: {2}]
  %9 = xla_tuple %s6, %s7, %s8
  %s10 = sld [smem:[#allocation0]]
  $region50: #{tpu_custom_call.1} parent=0
    _
  %s12 = ssub.s32 1, %s10
  %s13 = scalar_select 0, %s12, %s10
  $region1: #{tpu_custom_call.1} parent=0
    #allocation2 [shape = 'u8[8192]{0}', space=vmem, size = 0x2000, scoped, tag = 'output window, operand 0, single buffered']
    #allocation3 [shape = 's32[1]{0}', space=sflag, size = 0x4, scoped, tag = 'scoped memory for tpu_custom_call.1']
    #allocation4 [shape = 'u8[8192]{0}', space=vmem, size = 0x2000, scoped, tag = 'output window, operand 2, single buffered']
    #allocation5 [shape = 's32[1]{0}', space=sflag, size = 0x4, scoped, tag = 'scoped memory for tpu_custom_call.1']
    %14 = vsyncpa [#allocation3], 0
    %15 = vsyncpa [#allocation5], 0
    // Predicated region
    $region2: #{tpu_custom_call.1} parent=1 // pred_check
      _
    $region3: #{tpu_custom_call.1} parent=1 // pred_check_branch
      %17 = sbr.rel (0) target = $region5
    $region4: #{tpu_custom_call.1} parent=1 // pred_region
      _
    $region5: #{tpu_custom_call.1} parent=1 // pred_fallthru
      _
    // Predicated region
    $region6: #{tpu_custom_call.1} parent=1 // pred_check
      _
    $region7: #{tpu_custom_call.1} parent=1 // pred_check_branch
      %19 = sbr.rel (0) target = $region9
    $region8: #{tpu_custom_call.1} parent=1 // pred_region
      _
    $region9: #{tpu_custom_call.1} parent=1 // pred_fallthru
      _
    // Predicated region
    $region10: #{tpu_custom_call.1} parent=1 // pred_check
      _
    $region11: #{tpu_custom_call.1} parent=1 // pred_check_branch
      %21 = sbr.rel (0) target = $region13
    $region12: #{tpu_custom_call.1} parent=1 // pred_region
      _
    $region13: #{tpu_custom_call.1} parent=1 // pred_fallthru
      _
    // Predicated region
    $region14: #{tpu_custom_call.1} parent=1 // pred_check
      _
    $region15: #{tpu_custom_call.1} parent=1 // pred_check_branch
      %23 = sbr.rel (0) target = $region17
    $region16: #{tpu_custom_call.1} parent=1 // pred_region
      _
    $region17: #{tpu_custom_call.1} parent=1 // pred_fallthru
      _
    // Predicated region
    $region18: #{tpu_custom_call.1} parent=1 // pred_check
      _
    $region19: #{tpu_custom_call.1} parent=1 // pred_check_branch
      %25 = sbr.rel (0) target = $region21
    $region20: #{tpu_custom_call.1} parent=1 // pred_region
      _
    $region21: #{tpu_custom_call.1} parent=1 // pred_fallthru
      _
    // Predicated region
    $region22: #{tpu_custom_call.1} parent=1 // pred_check
      _
    $region23: #{tpu_custom_call.1} parent=1 // pred_check_branch
      %27 = sbr.rel (0) target = $region25
    $region24: #{tpu_custom_call.1} parent=1 // pred_region
      _
    $region25: #{tpu_custom_call.1} parent=1 // pred_fallthru
      _
    %v28 = vld [vmem:[%s0] sm:$0xff]
    %v29 = vld [vmem:[%s0 + $0x8] sm:$0xff]
    %v30 = vld [vmem:[%s2] sm:$0xff]
    %v31 = vld [vmem:[%s2 + $0x8] sm:$0xff]
    %v32 = vld [vmem:[%s2 + $0x10] sm:$0xff]
    %v33 = vld [vmem:[%s2 + $0x18] sm:$0xff]
    %v34 = vld [vmem:[%s3] sm:$0x1]
    %v36 = vperm.slane %v34, 0
    %vm38 = vcmask 261120
    %v40 = vsel %vm38, %v28, 0
    %v43 = vsel %vm38, %v29, 0
    %45 = vmatpush.msra.mxu0 0.0
    %46 = vmatpush.msra.mxu0 0.0
    %47 = vmatpush.msra.mxu0 0.0
    %48 = vmatpush.msra.mxu0 0.0
    %49 = vmatpush.msra.mxu0 0.0
    %50 = vmatpush.msra.mxu0 0.0
    %51 = vmatpush.msra.mxu0 0.0
    %52 = vmatpush.msra.mxu0 0.0
    %53 = vmatpush.msra.mxu0 0.0
    %54 = vmatpush.msra.mxu0 0.0
    %55 = vmatpush.msra.mxu0 0.0
    %56 = vmatpush.msra.mxu0 0.0
    %57 = vmatpush.msra.mxu0 %v33
    %58 = vmatpush.msra.mxu0 %v32
    %59 = vmatpush.msra.mxu0 %v31
    %60 = vmatpush.msra.mxu0 %v30
    %61 = vmatmul.f32.gmra.mxu0 %v40
    %v62 = vpop.f32.mrf.mxu0
    %v63 = vadd.f32 %v36, %v62
    %64 = vmatmul.f32.gmra.mxu0 %v43
    %v65 = vpop.f32.mrf.mxu0
    %v66 = vadd.f32 %v36, %v65
    %67 = vdwg.mxu0
    %v68 = vxor.u32 %v63, 2147483648
    %v69 = vxor.u32 %v66, 2147483648
    %v70 = vmul.f32 %v68, 1.442695
    %v71 = vpow.pop %v70
    %v72 = vmul.f32 %v69, 1.442695
    %v73 = vpow.pop %v72
    %v74 = vadd.f32 %v71, 1.0
    %v75 = vadd.f32 %v73, 1.0
    %v76 = vrcp.pop %v74
    %v77 = vmul.f32 %v74, %v76
    %v78 = vsub.f32 1.0, %v77
    %v79 = vmul.f32 %v76, %v78
    %v80 = vadd.f32 %v76, %v79
    %vm81 = vweird.f32 %v74
    %vm82 = vweird.f32 %v76
    %vm83 = vmor %vm81, %vm82
    %v84 = vsel %vm83, %v76, %v80
    %v85 = vand.u32 2147483647, %v74
    %vm86 = vcmp.eq.f32.partialorder %v85, 8.507059e+37
    %v87 = vand.u32 %v74, 2147483648
    %v88 = vor.u32 1.1754944e-38, %v87
    %v89 = vsel %vm86, %v88, %v84
    %v90 = vmul.f32 1.0, %v89
    %v91 = vrcp.pop %v75
    %v92 = vmul.f32 %v75, %v91
    %v93 = vsub.f32 1.0, %v92
    %v94 = vmul.f32 %v91, %v93
    %v95 = vadd.f32 %v91, %v94
    %vm96 = vweird.f32 %v75
    %vm97 = vweird.f32 %v91
    %vm98 = vmor %vm96, %vm97
    %v99 = vsel %vm98, %v91, %v95
    %v100 = vand.u32 2147483647, %v75
    %vm101 = vcmp.eq.f32.partialorder %v100, 8.507059e+37
    %v102 = vand.u32 %v75, 2147483648
    %v103 = vor.u32 1.1754944e-38, %v102
    %v104 = vsel %vm101, %v103, %v99
    %v105 = vmul.f32 1.0, %v104
    %v106 = vmul.f32 %v63, %v90
    %v107 = vmul.f32 %v66, %v105
    %v108 = vld [vmem:[%s4] sm:$0x3]
    %v109 = vld [vmem:[%s5] sm:$0x1]
    %v111 = vperm.slane %v109, 0
    %vm113 = vcmask 15360
    %v115 = vsel %vm113, %v106, 0
    %v118 = vsel %vm113, %v107, 0
    %vm120 = vcmask 1041408
    %v122 = vsel %vm120, %v108, 0
    %124 = vmatpush.msra.mxu0 0.0
    %125 = vmatpush.msra.mxu0 0.0
    %126 = vmatpush.msra.mxu0 0.0
    %127 = vmatpush.msra.mxu0 0.0
    %128 = vmatpush.msra.mxu0 0.0
    %129 = vmatpush.msra.mxu0 0.0
    %130 = vmatpush.msra.mxu0 0.0
    %131 = vmatpush.msra.mxu0 0.0
    %132 = vmatpush.msra.mxu0 0.0
    %133 = vmatpush.msra.mxu0 0.0
    %134 = vmatpush.msra.mxu0 0.0
    %135 = vmatpush.msra.mxu0 0.0
    %136 = vmatpush.msra.mxu0 0.0
    %137 = vmatpush.msra.mxu0 0.0
    %138 = vmatpush.msra.mxu0 0.0
    %139 = vmatpush.msra.mxu0 %v122
    %140 = vmatmul.f32.gmra.mxu0 %v115
    %v141 = vpop.f32.mrf.mxu0
    %v142 = vadd.f32 %v111, %v141
    %143 = vmatmul.f32.gmra.mxu0 %v118
    %v144 = vpop.f32.mrf.mxu0
    %v145 = vadd.f32 %v111, %v144
    %146 = vdwg.mxu0
    %v147 = vld [vmem:[%s1] sm:$0xff]
    %v148 = vld [vmem:[%s1 + $0x8] sm:$0xff]
    %v149 = vadd.f32 %v142, %v147
    %v150 = vadd.f32 %v145, %v148
    %151 = vst.msk [vmem:[%s7] sm:$0xff] %vm113, %v106
    %152 = vst.msk [vmem:[%s7 + $0x8] sm:$0xff] %vm113, %v107
    %153 = vst.msk [vmem:[#allocation4] sm:$0xff] %vm38, %v142
    %154 = vst.msk [vmem:[#allocation4 + $0x8] sm:$0xff] %vm38, %v145
    %155 = vst.msk [vmem:[#allocation2] sm:$0xff] %vm38, %v149
    %156 = vst.msk [vmem:[#allocation2 + $0x8] sm:$0xff] %vm38, %v150
    // Predicated region
    $region26: #{tpu_custom_call.1} parent=1 // pred_check
      _
    $region27: #{tpu_custom_call.1} parent=1 // pred_check_branch
      %158 = sbr.rel (0) target = $region29
    $region28: #{tpu_custom_call.1} parent=1 // pred_region
      %160 = vsyncadd [#allocation3], 0
      %s161 = sshll.u32 [#allocation2], 4
      %s162 = int_to_ptr.vmem [resolvable:$true] %s161
      %s163 = sshll.u32 %s6, 4
      %s164 = int_to_ptr.hbm [resolvable:$true] %s163
      %169 = dma.vmem_to_hbm [thread:$0]  %s162, 256, %s164, [#allocation3], 128, 128, 8
    $region29: #{tpu_custom_call.1} parent=1 // pred_fallthru
      _
    // Predicated region
    $region30: #{tpu_custom_call.1} parent=1 // pred_check
      _
    $region31: #{tpu_custom_call.1} parent=1 // pred_check_branch
      %171 = sbr.rel (0) target = $region33
    $region32: #{tpu_custom_call.1} parent=1 // pred_region
      _
    $region33: #{tpu_custom_call.1} parent=1 // pred_fallthru
      _
    // Predicated region
    $region34: #{tpu_custom_call.1} parent=1 // pred_check
      _
    $region35: #{tpu_custom_call.1} parent=1 // pred_check_branch
      %173 = sbr.rel (0) target = $region37
    $region36: #{tpu_custom_call.1} parent=1 // pred_region
      %175 = vsyncadd [#allocation5], 0
      %s176 = sshll.u32 [#allocation4], 4
      %s177 = int_to_ptr.vmem [resolvable:$true] %s176
      %s178 = sshll.u32 %s8, 4
      %s179 = int_to_ptr.hbm [resolvable:$true] %s178
      %184 = dma.vmem_to_hbm [thread:$0]  %s177, 256, %s179, [#allocation5], 128, 128, 8
    $region37: #{tpu_custom_call.1} parent=1 // pred_fallthru
      _
    // Predicated region
    $region38: #{tpu_custom_call.1} parent=1 // pred_check
      _
    $region39: #{tpu_custom_call.1} parent=1 // pred_check_branch
      %186 = sbr.rel (0) target = $region41
    $region40: #{tpu_custom_call.1} parent=1 // pred_region
      %188 = dma.done [#allocation3], 256
    $region41: #{tpu_custom_call.1} parent=1 // pred_fallthru
      _
    // Predicated region
    $region42: #{tpu_custom_call.1} parent=1 // pred_check
      _
    $region43: #{tpu_custom_call.1} parent=1 // pred_check_branch
      %190 = sbr.rel (0) target = $region45
    $region44: #{tpu_custom_call.1} parent=1 // pred_region
      _
    $region45: #{tpu_custom_call.1} parent=1 // pred_fallthru
      _
    // Predicated region
    $region46: #{tpu_custom_call.1} parent=1 // pred_check
      _
    $region47: #{tpu_custom_call.1} parent=1 // pred_check_branch
      %192 = sbr.rel (0) target = $region49
    $region48: #{tpu_custom_call.1} parent=1 // pred_region
      %194 = dma.done [#allocation5], 256
    $region49: #{tpu_custom_call.1} parent=1 // pred_fallthru
      _
    %195 = vsyncpa [#allocation3], 1
    %196 = vsyncpa [#allocation5], 1

</llo_original>
